<compile_context>
chip_gen: v5e
topology: v5e:2x2
jax: 0.10.0
libtpu: 0.0.40
codegen_flags: <defaults>
</compile_context>

<pallas_src>
import jax
import jax.numpy as jnp
from jax.experimental import pallas as pl
from jax.experimental.pallas import tpu as pltpu

H = 2          # true hidden size (nn.RNN hidden_size=2)
H_PAD = 128    # lane-aligned padded hidden size
P_ROWS = 8     # packed-parameter rows (one full sublane tile)


def rnn_fc_kernel(x_ref, p_ref, out_ref):
    """Elman RNN (tanh) + Linear(2,1) head, whole sequence per invocation.

    x_ref:   (B_pad, T)   lane-dense inputs: batch on sublanes, time on lanes
    p_ref:   (8, 128)     packed parameters:
                            row 0: W_ih.T (input_size = 1), zero-padded
                            row 1: b_ih + b_hh,             zero-padded
                            row 2: diag(W_hh),              zero-padded
                            row 3: lane0 = W_hh[0,1], lane1 = W_hh[1,0], rest 0
                            row 4: W_fc,                    zero-padded
                            row 5: lane0 = b_fc
    out_ref: (B_pad, T)   lane-dense outputs (same layout as x_ref)
    """
    T = x_ref.shape[1]

    # One vreg worth of parameters; all static row slices, loaded once.
    p = p_ref[...]                 # (8, 128)
    wih = p[0:1, :]                # (1, H_PAD)
    bias = p[1:2, :]               # (1, H_PAD)
    diag = p[2:3, :]               # (1, H_PAD)
    offd = p[3:4, :]               # (1, H_PAD)
    wfc = p[4:5, :]                # (1, H_PAD)
    bfc = p[5:6, 0:1]              # (1, 1)

    x = x_ref[...]                 # (B_pad, T); loop-invariant, one vreg

    # t = 0: h_{-1} == 0, so the recurrent term vanishes.
    h = jnp.tanh(x[:, 0:1] * wih + bias)                      # (B_pad, H_PAD)
    ys = [jnp.sum(h * wfc, axis=-1, keepdims=True) + bfc]     # (B_pad, 1)

    # Serial recurrence; T is static -> fully unrolled; h lives in vregs.
    for t in range(1, T):
        # lanes 0/1 of `swapped` hold (h1, h0); junk on other lanes is killed
        # by the zero-padded off-diagonal coefficient row.  (On v5e the two
        # rotates may serialize on heterogeneous XLUs -- acceptable at T=8.)
        swapped = pltpu.roll(h, 1, axis=1) + pltpu.roll(h, H_PAD - 1, axis=1)
        rec = h * diag + swapped * offd        # == h @ W_hh.T on lanes 0..1
        h = jnp.tanh(x[:, t:t + 1] * wih + bias + rec)
        # fc partial: off the h-dependency chain, hides behind the next tanh.
        ys.append(jnp.sum(h * wfc, axis=-1, keepdims=True) + bfc)

    # Single batched, lane-dense store (time on the lane axis).
    out_ref[...] = jnp.concatenate(ys, axis=1).astype(out_ref.dtype)


def prepare_params(params):
    """One-time (setup-path) packing of the tiny params into one (8,128) block."""
    w_ih = jnp.asarray(params["w_ih"], jnp.float32)            # (H, 1)
    w_hh = jnp.asarray(params["w_hh"], jnp.float32)            # (H, H)
    b = (jnp.asarray(params["b_ih"], jnp.float32)
         + jnp.asarray(params["b_hh"], jnp.float32))           # (H,)
    w_fc = jnp.asarray(params["w_fc"], jnp.float32)            # (1, H)
    b_fc = jnp.asarray(params["b_fc"], jnp.float32)            # (1,)

    p = jnp.zeros((P_ROWS, H_PAD), jnp.float32)
    p = p.at[0, :H].set(w_ih[:, 0])
    p = p.at[1, :H].set(b)
    p = p.at[2, :H].set(jnp.diagonal(w_hh))
    p = p.at[3, 0].set(w_hh[0, 1])
    p = p.at[3, 1].set(w_hh[1, 0])
    p = p.at[4, :H].set(w_fc[0, :])
    p = p.at[5, 0].set(b_fc[0])
    return p


def sine_model_forward(xs, packed):
    """xs: (B, T, 1) float32 batch_first (like the PyTorch module). Returns (B, T, 1)."""
    B, T, _ = xs.shape
    B_pad = ((B + 7) // 8) * 8          # round batch up to full sublane tiles

    # Lane-dense kernel input: (B_pad, T), batch on sublanes, time on lanes.
    x2 = jnp.pad(xs[..., 0].astype(jnp.float32), ((0, B_pad - B), (0, 0)))

    cost = pl.CostEstimate(
        flops=10 * B_pad * T * H_PAD,
        transcendentals=B_pad * T * H_PAD,
        bytes_accessed=2 * B_pad * T * 4 + P_ROWS * H_PAD * 4,
    )

    # TODO(synk): for large B, add a leading batch grid axis with
    # dimension_semantics=("parallel",) (2 TCs on v7x, DMA/compute pipelining on
    # v5e/v6e) and size the batch block against the per-generation VMEM budget.
    out = pl.pallas_call(
        rnn_fc_kernel,
        out_shape=jax.ShapeDtypeStruct((B_pad, T), jnp.float32),
        in_specs=[
            pl.BlockSpec(memory_space=pltpu.MemorySpace.VMEM),   # x (B_pad, T)
            pl.BlockSpec(memory_space=pltpu.MemorySpace.VMEM),   # packed params
        ],
        out_specs=pl.BlockSpec(memory_space=pltpu.MemorySpace.VMEM),
        cost_estimate=cost,
    )(x2, packed)

    return out[:B, :, None]             # back to batch_first (B, T, 1)


def sine_model_forward_ref(xs, params):
    """Pure-JAX reference matching torch: h_t = tanh(x W_ih^T + b_ih + h W_hh^T + b_hh)."""
    w_ih, w_hh = params["w_ih"], params["w_hh"]
    b_ih, b_hh = params["b_ih"], params["b_hh"]
    w_fc, b_fc = params["w_fc"], params["b_fc"]
    B, T, _ = xs.shape

    def cell(h, x_t):
        h_new = jnp.tanh(x_t @ w_ih.T + b_ih + h @ w_hh.T + b_hh)
        return h_new, h_new

    h0 = jnp.zeros((B, H), jnp.float32)
    _, hs = jax.lax.scan(cell, h0, jnp.transpose(xs, (1, 0, 2)))  # hs: (T, B, H)
    out = hs @ w_fc.T + b_fc                                      # (T, B, 1)
    return jnp.transpose(out, (1, 0, 2))


if __name__ == "__main__":
    key = jax.random.PRNGKey(0)
    kx, k1, k2, k3, k4, k5, k6 = jax.random.split(key, 7)

    B, T = 2, 8  # small batch, short sequence; input_size = 1 per the module

    # PyTorch default init: U(-1/sqrt(hidden_size), 1/sqrt(hidden_size)) for both
    # nn.RNN and nn.Linear(2, 1) (fan_in = 2).
    bound = float(1.0 / jnp.sqrt(jnp.float32(H)))
    params = {
        "w_ih": jax.random.uniform(k1, (H, 1), jnp.float32, -bound, bound),
        "w_hh": jax.random.uniform(k2, (H, H), jnp.float32, -bound, bound),
        "b_ih": jax.random.uniform(k3, (H,), jnp.float32, -bound, bound),
        "b_hh": jax.random.uniform(k4, (H,), jnp.float32, -bound, bound),
        "w_fc": jax.random.uniform(k5, (1, H), jnp.float32, -bound, bound),
        "b_fc": jax.random.uniform(k6, (1,), jnp.float32, -bound, bound),
    }

    # Pack / pad parameters ONCE (setup path, not per forward call).
    packed = jax.block_until_ready(prepare_params(params))

    # A sine-wave-flavored input plus a dash of noise, shape (B, T, 1).
    base = jnp.sin(jnp.linspace(0.0, 2.0 * jnp.pi, B * T, dtype=jnp.float32))
    xs = (base.reshape(B, T, 1)
          + 0.01 * jax.random.normal(kx, (B, T, 1), jnp.float32)).astype(jnp.float32)

    fwd = jax.jit(sine_model_forward)
    out = jax.block_until_ready(fwd(xs, packed))

    ref = sine_model_forward_ref(xs, params)
    assert out.shape == (B, T, 1), out.shape
    assert jnp.allclose(out, ref, atol=1e-5, rtol=1e-5), (out, ref)

    print("KERNEL_OK")
</pallas_src>

<mosaic_0001>
module attributes {stable_mosaic.version = 11 : i64} {
  func.func @rnn_fc_kernel(%arg0: memref<8x8xf32, #tpu.memory_space<vmem>>, %arg1: memref<8x128xf32, #tpu.memory_space<vmem>>, %arg2: memref<8x8xf32, #tpu.memory_space<vmem>>) attributes {dimension_semantics = [], scalar_prefetch = 0 : i64, scratch_operands = 0 : i64, tpu.core_type = #tpu.core_type<tc>} {
    %c0 = arith.constant 0 : index
    %c0_0 = arith.constant 0 : index
    %0 = vector.load %arg1[%c0, %c0_0] : memref<8x128xf32, #tpu.memory_space<vmem>>, vector<8x128xf32>
    %1 = vector.extract_strided_slice %0 {offsets = [0, 0], sizes = [1, 128], strides = [1, 1]} : vector<8x128xf32> to vector<1x128xf32>
    %2 = vector.extract_strided_slice %0 {offsets = [1, 0], sizes = [1, 128], strides = [1, 1]} : vector<8x128xf32> to vector<1x128xf32>
    %3 = vector.extract_strided_slice %0 {offsets = [2, 0], sizes = [1, 128], strides = [1, 1]} : vector<8x128xf32> to vector<1x128xf32>
    %4 = vector.extract_strided_slice %0 {offsets = [3, 0], sizes = [1, 128], strides = [1, 1]} : vector<8x128xf32> to vector<1x128xf32>
    %5 = vector.extract_strided_slice %0 {offsets = [4, 0], sizes = [1, 128], strides = [1, 1]} : vector<8x128xf32> to vector<1x128xf32>
    %6 = vector.extract_strided_slice %0 {offsets = [5, 0], sizes = [1, 1], strides = [1, 1]} : vector<8x128xf32> to vector<1x1xf32>
    %c0_1 = arith.constant 0 : index
    %c0_2 = arith.constant 0 : index
    %7 = vector.load %arg0[%c0_1, %c0_2] : memref<8x8xf32, #tpu.memory_space<vmem>>, vector<8x8xf32>
    %8 = vector.extract_strided_slice %7 {offsets = [0, 0], sizes = [8, 1], strides = [1, 1]} : vector<8x8xf32> to vector<8x1xf32>
    %9 = vector.broadcast %8 : vector<8x1xf32> to vector<8x128xf32>
    %10 = vector.broadcast %1 : vector<1x128xf32> to vector<8x128xf32>
    %11 = arith.mulf %9, %10 : vector<8x128xf32>
    %12 = vector.broadcast %2 : vector<1x128xf32> to vector<8x128xf32>
    %13 = arith.addf %11, %12 : vector<8x128xf32>
    %14 = math.tanh %13 : vector<8x128xf32>
    %15 = vector.broadcast %5 : vector<1x128xf32> to vector<8x128xf32>
    %16 = arith.mulf %14, %15 : vector<8x128xf32>
    %cst = arith.constant dense<0.000000e+00> : vector<8xf32>
    %17 = vector.multi_reduction <add>, %16, %cst [1] : vector<8x128xf32> to vector<8xf32>
    %18 = vector.shape_cast %17 : vector<8xf32> to vector<8x1xf32>
    %19 = vector.broadcast %6 : vector<1x1xf32> to vector<8x1xf32>
    %20 = arith.addf %18, %19 : vector<8x1xf32>
    %c1_i32 = arith.constant 1 : i32
    %21 = tpu.dynamic_rotate %14 by %c1_i32 dim 1 : vector<8x128xf32>, i32 -> vector<8x128xf32>
    %c127_i32 = arith.constant 127 : i32
    %22 = tpu.dynamic_rotate %14 by %c127_i32 dim 1 : vector<8x128xf32>, i32 -> vector<8x128xf32>
    %23 = arith.addf %21, %22 : vector<8x128xf32>
    %24 = vector.broadcast %3 : vector<1x128xf32> to vector<8x128xf32>
    %25 = arith.mulf %14, %24 : vector<8x128xf32>
    %26 = vector.broadcast %4 : vector<1x128xf32> to vector<8x128xf32>
    %27 = arith.mulf %23, %26 : vector<8x128xf32>
    %28 = arith.addf %25, %27 : vector<8x128xf32>
    %29 = vector.extract_strided_slice %7 {offsets = [0, 1], sizes = [8, 1], strides = [1, 1]} : vector<8x8xf32> to vector<8x1xf32>
    %30 = vector.broadcast %29 : vector<8x1xf32> to vector<8x128xf32>
    %31 = vector.broadcast %1 : vector<1x128xf32> to vector<8x128xf32>
    %32 = arith.mulf %30, %31 : vector<8x128xf32>
    %33 = vector.broadcast %2 : vector<1x128xf32> to vector<8x128xf32>
    %34 = arith.addf %32, %33 : vector<8x128xf32>
    %35 = arith.addf %34, %28 : vector<8x128xf32>
    %36 = math.tanh %35 : vector<8x128xf32>
    %37 = vector.broadcast %5 : vector<1x128xf32> to vector<8x128xf32>
    %38 = arith.mulf %36, %37 : vector<8x128xf32>
    %cst_3 = arith.constant dense<0.000000e+00> : vector<8xf32>
    %39 = vector.multi_reduction <add>, %38, %cst_3 [1] : vector<8x128xf32> to vector<8xf32>
    %40 = vector.shape_cast %39 : vector<8xf32> to vector<8x1xf32>
    %41 = vector.broadcast %6 : vector<1x1xf32> to vector<8x1xf32>
    %42 = arith.addf %40, %41 : vector<8x1xf32>
    %c1_i32_4 = arith.constant 1 : i32
    %43 = tpu.dynamic_rotate %36 by %c1_i32_4 dim 1 : vector<8x128xf32>, i32 -> vector<8x128xf32>
    %c127_i32_5 = arith.constant 127 : i32
    %44 = tpu.dynamic_rotate %36 by %c127_i32_5 dim 1 : vector<8x128xf32>, i32 -> vector<8x128xf32>
    %45 = arith.addf %43, %44 : vector<8x128xf32>
    %46 = vector.broadcast %3 : vector<1x128xf32> to vector<8x128xf32>
    %47 = arith.mulf %36, %46 : vector<8x128xf32>
    %48 = vector.broadcast %4 : vector<1x128xf32> to vector<8x128xf32>
    %49 = arith.mulf %45, %48 : vector<8x128xf32>
    %50 = arith.addf %47, %49 : vector<8x128xf32>
    %51 = vector.extract_strided_slice %7 {offsets = [0, 2], sizes = [8, 1], strides = [1, 1]} : vector<8x8xf32> to vector<8x1xf32>
    %52 = vector.broadcast %51 : vector<8x1xf32> to vector<8x128xf32>
    %53 = vector.broadcast %1 : vector<1x128xf32> to vector<8x128xf32>
    %54 = arith.mulf %52, %53 : vector<8x128xf32>
    %55 = vector.broadcast %2 : vector<1x128xf32> to vector<8x128xf32>
    %56 = arith.addf %54, %55 : vector<8x128xf32>
    %57 = arith.addf %56, %50 : vector<8x128xf32>
    %58 = math.tanh %57 : vector<8x128xf32>
    %59 = vector.broadcast %5 : vector<1x128xf32> to vector<8x128xf32>
    %60 = arith.mulf %58, %59 : vector<8x128xf32>
    %cst_6 = arith.constant dense<0.000000e+00> : vector<8xf32>
    %61 = vector.multi_reduction <add>, %60, %cst_6 [1] : vector<8x128xf32> to vector<8xf32>
    %62 = vector.shape_cast %61 : vector<8xf32> to vector<8x1xf32>
    %63 = vector.broadcast %6 : vector<1x1xf32> to vector<8x1xf32>
    %64 = arith.addf %62, %63 : vector<8x1xf32>
    %c1_i32_7 = arith.constant 1 : i32
    %65 = tpu.dynamic_rotate %58 by %c1_i32_7 dim 1 : vector<8x128xf32>, i32 -> vector<8x128xf32>
    %c127_i32_8 = arith.constant 127 : i32
    %66 = tpu.dynamic_rotate %58 by %c127_i32_8 dim 1 : vector<8x128xf32>, i32 -> vector<8x128xf32>
    %67 = arith.addf %65, %66 : vector<8x128xf32>
    %68 = vector.broadcast %3 : vector<1x128xf32> to vector<8x128xf32>
    %69 = arith.mulf %58, %68 : vector<8x128xf32>
    %70 = vector.broadcast %4 : vector<1x128xf32> to vector<8x128xf32>
    %71 = arith.mulf %67, %70 : vector<8x128xf32>
    %72 = arith.addf %69, %71 : vector<8x128xf32>
    %73 = vector.extract_strided_slice %7 {offsets = [0, 3], sizes = [8, 1], strides = [1, 1]} : vector<8x8xf32> to vector<8x1xf32>
    %74 = vector.broadcast %73 : vector<8x1xf32> to vector<8x128xf32>
    %75 = vector.broadcast %1 : vector<1x128xf32> to vector<8x128xf32>
    %76 = arith.mulf %74, %75 : vector<8x128xf32>
    %77 = vector.broadcast %2 : vector<1x128xf32> to vector<8x128xf32>
    %78 = arith.addf %76, %77 : vector<8x128xf32>
    %79 = arith.addf %78, %72 : vector<8x128xf32>
    %80 = math.tanh %79 : vector<8x128xf32>
    %81 = vector.broadcast %5 : vector<1x128xf32> to vector<8x128xf32>
    %82 = arith.mulf %80, %81 : vector<8x128xf32>
    %cst_9 = arith.constant dense<0.000000e+00> : vector<8xf32>
    %83 = vector.multi_reduction <add>, %82, %cst_9 [1] : vector<8x128xf32> to vector<8xf32>
    %84 = vector.shape_cast %83 : vector<8xf32> to vector<8x1xf32>
    %85 = vector.broadcast %6 : vector<1x1xf32> to vector<8x1xf32>
    %86 = arith.addf %84, %85 : vector<8x1xf32>
    %c1_i32_10 = arith.constant 1 : i32
    %87 = tpu.dynamic_rotate %80 by %c1_i32_10 dim 1 : vector<8x128xf32>, i32 -> vector<8x128xf32>
    %c127_i32_11 = arith.constant 127 : i32
    %88 = tpu.dynamic_rotate %80 by %c127_i32_11 dim 1 : vector<8x128xf32>, i32 -> vector<8x128xf32>
    %89 = arith.addf %87, %88 : vector<8x128xf32>
    %90 = vector.broadcast %3 : vector<1x128xf32> to vector<8x128xf32>
    %91 = arith.mulf %80, %90 : vector<8x128xf32>
    %92 = vector.broadcast %4 : vector<1x128xf32> to vector<8x128xf32>
    %93 = arith.mulf %89, %92 : vector<8x128xf32>
    %94 = arith.addf %91, %93 : vector<8x128xf32>
    %95 = vector.extract_strided_slice %7 {offsets = [0, 4], sizes = [8, 1], strides = [1, 1]} : vector<8x8xf32> to vector<8x1xf32>
    %96 = vector.broadcast %95 : vector<8x1xf32> to vector<8x128xf32>
    %97 = vector.broadcast %1 : vector<1x128xf32> to vector<8x128xf32>
    %98 = arith.mulf %96, %97 : vector<8x128xf32>
    %99 = vector.broadcast %2 : vector<1x128xf32> to vector<8x128xf32>
    %100 = arith.addf %98, %99 : vector<8x128xf32>
    %101 = arith.addf %100, %94 : vector<8x128xf32>
    %102 = math.tanh %101 : vector<8x128xf32>
    %103 = vector.broadcast %5 : vector<1x128xf32> to vector<8x128xf32>
    %104 = arith.mulf %102, %103 : vector<8x128xf32>
    %cst_12 = arith.constant dense<0.000000e+00> : vector<8xf32>
    %105 = vector.multi_reduction <add>, %104, %cst_12 [1] : vector<8x128xf32> to vector<8xf32>
    %106 = vector.shape_cast %105 : vector<8xf32> to vector<8x1xf32>
    %107 = vector.broadcast %6 : vector<1x1xf32> to vector<8x1xf32>
    %108 = arith.addf %106, %107 : vector<8x1xf32>
    %c1_i32_13 = arith.constant 1 : i32
    %109 = tpu.dynamic_rotate %102 by %c1_i32_13 dim 1 : vector<8x128xf32>, i32 -> vector<8x128xf32>
    %c127_i32_14 = arith.constant 127 : i32
    %110 = tpu.dynamic_rotate %102 by %c127_i32_14 dim 1 : vector<8x128xf32>, i32 -> vector<8x128xf32>
    %111 = arith.addf %109, %110 : vector<8x128xf32>
    %112 = vector.broadcast %3 : vector<1x128xf32> to vector<8x128xf32>
    %113 = arith.mulf %102, %112 : vector<8x128xf32>
    %114 = vector.broadcast %4 : vector<1x128xf32> to vector<8x128xf32>
    %115 = arith.mulf %111, %114 : vector<8x128xf32>
    %116 = arith.addf %113, %115 : vector<8x128xf32>
    %117 = vector.extract_strided_slice %7 {offsets = [0, 5], sizes = [8, 1], strides = [1, 1]} : vector<8x8xf32> to vector<8x1xf32>
    %118 = vector.broadcast %117 : vector<8x1xf32> to vector<8x128xf32>
    %119 = vector.broadcast %1 : vector<1x128xf32> to vector<8x128xf32>
    %120 = arith.mulf %118, %119 : vector<8x128xf32>
    %121 = vector.broadcast %2 : vector<1x128xf32> to vector<8x128xf32>
    %122 = arith.addf %120, %121 : vector<8x128xf32>
    %123 = arith.addf %122, %116 : vector<8x128xf32>
    %124 = math.tanh %123 : vector<8x128xf32>
    %125 = vector.broadcast %5 : vector<1x128xf32> to vector<8x128xf32>
    %126 = arith.mulf %124, %125 : vector<8x128xf32>
    %cst_15 = arith.constant dense<0.000000e+00> : vector<8xf32>
    %127 = vector.multi_reduction <add>, %126, %cst_15 [1] : vector<8x128xf32> to vector<8xf32>
    %128 = vector.shape_cast %127 : vector<8xf32> to vector<8x1xf32>
    %129 = vector.broadcast %6 : vector<1x1xf32> to vector<8x1xf32>
    %130 = arith.addf %128, %129 : vector<8x1xf32>
    %c1_i32_16 = arith.constant 1 : i32
    %131 = tpu.dynamic_rotate %124 by %c1_i32_16 dim 1 : vector<8x128xf32>, i32 -> vector<8x128xf32>
    %c127_i32_17 = arith.constant 127 : i32
    %132 = tpu.dynamic_rotate %124 by %c127_i32_17 dim 1 : vector<8x128xf32>, i32 -> vector<8x128xf32>
    %133 = arith.addf %131, %132 : vector<8x128xf32>
    %134 = vector.broadcast %3 : vector<1x128xf32> to vector<8x128xf32>
    %135 = arith.mulf %124, %134 : vector<8x128xf32>
    %136 = vector.broadcast %4 : vector<1x128xf32> to vector<8x128xf32>
    %137 = arith.mulf %133, %136 : vector<8x128xf32>
    %138 = arith.addf %135, %137 : vector<8x128xf32>
    %139 = vector.extract_strided_slice %7 {offsets = [0, 6], sizes = [8, 1], strides = [1, 1]} : vector<8x8xf32> to vector<8x1xf32>
    %140 = vector.broadcast %139 : vector<8x1xf32> to vector<8x128xf32>
    %141 = vector.broadcast %1 : vector<1x128xf32> to vector<8x128xf32>
    %142 = arith.mulf %140, %141 : vector<8x128xf32>
    %143 = vector.broadcast %2 : vector<1x128xf32> to vector<8x128xf32>
    %144 = arith.addf %142, %143 : vector<8x128xf32>
    %145 = arith.addf %144, %138 : vector<8x128xf32>
    %146 = math.tanh %145 : vector<8x128xf32>
    %147 = vector.broadcast %5 : vector<1x128xf32> to vector<8x128xf32>
    %148 = arith.mulf %146, %147 : vector<8x128xf32>
    %cst_18 = arith.constant dense<0.000000e+00> : vector<8xf32>
    %149 = vector.multi_reduction <add>, %148, %cst_18 [1] : vector<8x128xf32> to vector<8xf32>
    %150 = vector.shape_cast %149 : vector<8xf32> to vector<8x1xf32>
    %151 = vector.broadcast %6 : vector<1x1xf32> to vector<8x1xf32>
    %152 = arith.addf %150, %151 : vector<8x1xf32>
    %c1_i32_19 = arith.constant 1 : i32
    %153 = tpu.dynamic_rotate %146 by %c1_i32_19 dim 1 : vector<8x128xf32>, i32 -> vector<8x128xf32>
    %c127_i32_20 = arith.constant 127 : i32
    %154 = tpu.dynamic_rotate %146 by %c127_i32_20 dim 1 : vector<8x128xf32>, i32 -> vector<8x128xf32>
    %155 = arith.addf %153, %154 : vector<8x128xf32>
    %156 = vector.broadcast %3 : vector<1x128xf32> to vector<8x128xf32>
    %157 = arith.mulf %146, %156 : vector<8x128xf32>
    %158 = vector.broadcast %4 : vector<1x128xf32> to vector<8x128xf32>
    %159 = arith.mulf %155, %158 : vector<8x128xf32>
    %160 = arith.addf %157, %159 : vector<8x128xf32>
    %161 = vector.extract_strided_slice %7 {offsets = [0, 7], sizes = [8, 1], strides = [1, 1]} : vector<8x8xf32> to vector<8x1xf32>
    %162 = vector.broadcast %161 : vector<8x1xf32> to vector<8x128xf32>
    %163 = vector.broadcast %1 : vector<1x128xf32> to vector<8x128xf32>
    %164 = arith.mulf %162, %163 : vector<8x128xf32>
    %165 = vector.broadcast %2 : vector<1x128xf32> to vector<8x128xf32>
    %166 = arith.addf %164, %165 : vector<8x128xf32>
    %167 = arith.addf %166, %160 : vector<8x128xf32>
    %168 = math.tanh %167 : vector<8x128xf32>
    %169 = vector.broadcast %5 : vector<1x128xf32> to vector<8x128xf32>
    %170 = arith.mulf %168, %169 : vector<8x128xf32>
    %cst_21 = arith.constant dense<0.000000e+00> : vector<8xf32>
    %171 = vector.multi_reduction <add>, %170, %cst_21 [1] : vector<8x128xf32> to vector<8xf32>
    %172 = vector.shape_cast %171 : vector<8xf32> to vector<8x1xf32>
    %173 = vector.broadcast %6 : vector<1x1xf32> to vector<8x1xf32>
    %174 = arith.addf %172, %173 : vector<8x1xf32>
    %175 = tpu.concatenate %20, %42, %64, %86, %108, %130, %152, %174 in 1 : vector<8x1xf32>, vector<8x1xf32>, vector<8x1xf32>, vector<8x1xf32>, vector<8x1xf32>, vector<8x1xf32>, vector<8x1xf32>, vector<8x1xf32> -> vector<8x8xf32>
    %c0_22 = arith.constant 0 : index
    %c0_23 = arith.constant 0 : index
    %176 = vector.load %arg2[%c0_22, %c0_23] : memref<8x8xf32, #tpu.memory_space<vmem>>, vector<8x8xf32>
    tpu.vector_store %arg2[%c0_22, %c0_23], %175 {strides = array<i32>} : memref<8x8xf32, #tpu.memory_space<vmem>>, vector<8x8xf32>,
    return
  }
}

</mosaic_0001>

<llo_original>
// kernel: sine_model_forward.1
$region0: #{sine_model_forward.1}
  #allocation0 [shape = 'u32[]', space=smem, size = 0x4, offset = 0x4, fixed_abs, tag = 'smem constant byte address 0x4 - core index']
  #allocation1 [shape = 'u32[72,128]{1,0:T(1,128)}', space=vmem, size = 0x9000, scoped, tag = 'internal scratch']
  %s0 = inlined_call_operand.vmem [shape: f32[8,8], index: 0, kind: input, shape index: {}]
  %s1 = inlined_call_operand.vmem [shape: f32[8,128], index: 1, kind: input, shape index: {}]
  %s2 = inlined_call_operand.vmem [shape: f32[8,8], index: 2, kind: output, shape index: {}]
  %s3 = sld [smem:[#allocation0]]
  $region18: #{sine_model_forward.1} parent=0
    _
  %s5 = ssub.s32 1, %s3
  %s6 = scalar_select 0, %s5, %s3
  // Predicated region
  $region2: #{sine_model_forward.1} parent=0 // pred_check
    _
  $region3: #{sine_model_forward.1} parent=0 // pred_check_branch
    %8 = sbr.rel (0) target = $region5
  $region4: #{sine_model_forward.1} parent=0 // pred_region
    _
  $region5: #{sine_model_forward.1} parent=0 // pred_fallthru
    _
  // Predicated region
  $region6: #{sine_model_forward.1} parent=0 // pred_check
    _
  $region7: #{sine_model_forward.1} parent=0 // pred_check_branch
    %10 = sbr.rel (0) target = $region9
  $region8: #{sine_model_forward.1} parent=0 // pred_region
    _
  $region9: #{sine_model_forward.1} parent=0 // pred_fallthru
    _
  %v11 = vld [vmem:[%s1] sm:$0xff]
  %v12 = vld [vmem:[%s0] sm:$0xff]
  %14 = vset.pattern.permute.xlu0 0
  %15 = vperm.xlu0 %14, %v12
  %v16 = vpop.permute.xlu0 %15
  %v18 = vperm.slane %v11, 0
  %v19 = vmul.f32 %v16, %v18
  %v20 = vperm.slane %v11, 1
  %v21 = vadd.f32 %v19, %v20
  %v22 = vtanh.pop %v21
  %v23 = vperm.slane %v11, 4
  %v24 = vmul.f32 %v22, %v23
  %25 = vadd.xlane.f32.xlu0 %v24
  %v26 = vpop.xlane.xlu0 %25
  %v27 = vperm.slane %v11, 5
  %v28 = vadd.f32 %v26, %v27
  %29 = vrot.lane.b32.xlu0 %v22, 1
  %v30 = vpop.permute.xlu0 %29
  %31 = vrot.lane.b32.xlu0 %v22, 127
  %v32 = vpop.permute.xlu0 %31
  %v33 = vadd.f32 %v30, %v32
  %v34 = vperm.slane %v11, 2
  %v35 = vmul.f32 %v22, %v34
  %v36 = vperm.slane %v11, 3
  %v37 = vmul.f32 %v33, %v36
  %v38 = vadd.f32 %v35, %v37
  %39 = vset.pattern.permute.xlu0 1
  %40 = vperm.xlu0 %39, %v12
  %v41 = vpop.permute.xlu0 %40
  %v43 = vmul.f32 %v41, %v18
  %v44 = vadd.f32 %v43, %v20
  %v45 = vadd.f32 %v44, %v38
  %v46 = vtanh.pop %v45
  %v47 = vmul.f32 %v46, %v23
  %48 = vadd.xlane.f32.xlu0 %v47
  %v49 = vpop.xlane.xlu0 %48
  %v50 = vadd.f32 %v49, %v27
  %51 = vrot.lane.b32.xlu0 %v46, 1
  %v52 = vpop.permute.xlu0 %51
  %53 = vrot.lane.b32.xlu0 %v46, 127
  %v54 = vpop.permute.xlu0 %53
  %v55 = vadd.f32 %v52, %v54
  %v56 = vmul.f32 %v46, %v34
  %v57 = vmul.f32 %v55, %v36
  %v58 = vadd.f32 %v56, %v57
  %59 = vset.pattern.permute.xlu0 2
  %60 = vperm.xlu0 %59, %v12
  %v61 = vpop.permute.xlu0 %60
  %v63 = vmul.f32 %v61, %v18
  %v64 = vadd.f32 %v63, %v20
  %v65 = vadd.f32 %v64, %v58
  %v66 = vtanh.pop %v65
  %v67 = vmul.f32 %v66, %v23
  %68 = vadd.xlane.f32.xlu0 %v67
  %v69 = vpop.xlane.xlu0 %68
  %v70 = vadd.f32 %v69, %v27
  %71 = vrot.lane.b32.xlu0 %v66, 1
  %v72 = vpop.permute.xlu0 %71
  %73 = vrot.lane.b32.xlu0 %v66, 127
  %v74 = vpop.permute.xlu0 %73
  %v75 = vadd.f32 %v72, %v74
  %v76 = vmul.f32 %v66, %v34
  %v77 = vmul.f32 %v75, %v36
  %v78 = vadd.f32 %v76, %v77
  %79 = vset.pattern.permute.xlu0 3
  %80 = vperm.xlu0 %79, %v12
  %v81 = vpop.permute.xlu0 %80
  %v83 = vmul.f32 %v81, %v18
  %v84 = vadd.f32 %v83, %v20
  %v85 = vadd.f32 %v84, %v78
  %v86 = vtanh.pop %v85
  %v87 = vmul.f32 %v86, %v23
  %88 = vadd.xlane.f32.xlu0 %v87
  %v89 = vpop.xlane.xlu0 %88
  %v90 = vadd.f32 %v89, %v27
  %91 = vrot.lane.b32.xlu0 %v86, 1
  %v92 = vpop.permute.xlu0 %91
  %93 = vrot.lane.b32.xlu0 %v86, 127
  %v94 = vpop.permute.xlu0 %93
  %v95 = vadd.f32 %v92, %v94
  %v96 = vmul.f32 %v86, %v34
  %v97 = vmul.f32 %v95, %v36
  %v98 = vadd.f32 %v96, %v97
  %99 = vset.pattern.permute.xlu0 4
  %100 = vperm.xlu0 %99, %v12
  %v101 = vpop.permute.xlu0 %100
  %v103 = vmul.f32 %v101, %v18
  %v104 = vadd.f32 %v103, %v20
  %v105 = vadd.f32 %v104, %v98
  %v106 = vtanh.pop %v105
  %v107 = vmul.f32 %v106, %v23
  %108 = vadd.xlane.f32.xlu0 %v107
  %v109 = vpop.xlane.xlu0 %108
  %v110 = vadd.f32 %v109, %v27
  %111 = vrot.lane.b32.xlu0 %v106, 1
  %v112 = vpop.permute.xlu0 %111
  %113 = vrot.lane.b32.xlu0 %v106, 127
  %v114 = vpop.permute.xlu0 %113
  %v115 = vadd.f32 %v112, %v114
  %v116 = vmul.f32 %v106, %v34
  %v117 = vmul.f32 %v115, %v36
  %v118 = vadd.f32 %v116, %v117
  %119 = vset.pattern.permute.xlu0 5
  %120 = vperm.xlu0 %119, %v12
  %v121 = vpop.permute.xlu0 %120
  %v123 = vmul.f32 %v121, %v18
  %v124 = vadd.f32 %v123, %v20
  %v125 = vadd.f32 %v124, %v118
  %v126 = vtanh.pop %v125
  %v127 = vmul.f32 %v126, %v23
  %128 = vadd.xlane.f32.xlu0 %v127
  %v129 = vpop.xlane.xlu0 %128
  %v130 = vadd.f32 %v129, %v27
  %131 = vrot.lane.b32.xlu0 %v126, 1
  %v132 = vpop.permute.xlu0 %131
  %133 = vrot.lane.b32.xlu0 %v126, 127
  %v134 = vpop.permute.xlu0 %133
  %v135 = vadd.f32 %v132, %v134
  %v136 = vmul.f32 %v126, %v34
  %v137 = vmul.f32 %v135, %v36
  %v138 = vadd.f32 %v136, %v137
  %139 = vset.pattern.permute.xlu0 6
  %140 = vperm.xlu0 %139, %v12
  %v141 = vpop.permute.xlu0 %140
  %v143 = vmul.f32 %v141, %v18
  %v144 = vadd.f32 %v143, %v20
  %v145 = vadd.f32 %v144, %v138
  %v146 = vtanh.pop %v145
  %v147 = vmul.f32 %v146, %v23
  %148 = vadd.xlane.f32.xlu0 %v147
  %v149 = vpop.xlane.xlu0 %148
  %v150 = vadd.f32 %v149, %v27
  %151 = vrot.lane.b32.xlu0 %v146, 1
  %v152 = vpop.permute.xlu0 %151
  %153 = vrot.lane.b32.xlu0 %v146, 127
  %v154 = vpop.permute.xlu0 %153
  %v155 = vadd.f32 %v152, %v154
  %v156 = vmul.f32 %v146, %v34
  %v157 = vmul.f32 %v155, %v36
  %v158 = vadd.f32 %v156, %v157
  %159 = vset.pattern.permute.xlu0 7
  %160 = vperm.xlu0 %159, %v12
  %v161 = vpop.permute.xlu0 %160
  %v163 = vmul.f32 %v161, %v18
  %v164 = vadd.f32 %v163, %v20
  %v165 = vadd.f32 %v164, %v158
  %v166 = vtanh.pop %v165
  %v167 = vmul.f32 %v166, %v23
  %168 = vadd.xlane.f32.xlu0 %v167
  %v169 = vpop.xlane.xlu0 %168
  %v170 = vadd.f32 %v169, %v27
  %172 = vrot.lane.b32.xlu0 %v50, 1
  %v173 = vpop.permute.xlu0 %172
  %176 = vrot.lane.b32.xlu0 %v70, 2
  %v177 = vpop.permute.xlu0 %176
  %180 = vrot.lane.b32.xlu0 %v90, 3
  %v181 = vpop.permute.xlu0 %180
  %184 = vrot.lane.b32.xlu0 %v110, 4
  %v185 = vpop.permute.xlu0 %184
  %188 = vrot.lane.b32.xlu0 %v130, 5
  %v189 = vpop.permute.xlu0 %188
  %192 = vrot.lane.b32.xlu0 %v150, 6
  %v193 = vpop.permute.xlu0 %192
  %196 = vrot.lane.b32.xlu0 %v170, 7
  %v197 = vpop.permute.xlu0 %196
  %vm199 = vcmask 7168
  %v200 = vsel %vm199, %v28, %v173
  %vm201 = vcmask 15360
  %v202 = vsel %vm201, %v200, %v177
  %vm203 = vcmask 23552
  %v204 = vsel %vm203, %v202, %v181
  %vm205 = vcmask 31744
  %v206 = vsel %vm205, %v204, %v185
  %vm207 = vcmask 39936
  %v208 = vsel %vm207, %v206, %v189
  %vm209 = vcmask 48128
  %v210 = vsel %vm209, %v208, %v193
  %vm211 = vcmask 56320
  %v212 = vsel %vm211, %v210, %v197
  %vm213 = vcmask 64512
  %214 = vst.msk [vmem:[%s2] sm:$0xff] %vm213, %v212
  // Predicated region
  $region10: #{sine_model_forward.1} parent=0 // pred_check
    _
  $region11: #{sine_model_forward.1} parent=0 // pred_check_branch
    %216 = sbr.rel (0) target = $region13
  $region12: #{sine_model_forward.1} parent=0 // pred_region
    _
  $region13: #{sine_model_forward.1} parent=0 // pred_fallthru
    _
  // Predicated region
  $region14: #{sine_model_forward.1} parent=0 // pred_check
    _
  $region15: #{sine_model_forward.1} parent=0 // pred_check_branch
    %218 = sbr.rel (0) target = $region17
  $region16: #{sine_model_forward.1} parent=0 // pred_region
    _
  $region17: #{sine_model_forward.1} parent=0 // pred_fallthru
    _

</llo_original>
